<compile_context>
chip_gen: v7x
topology: tpu7x:2x2x1
jax: 0.10.0
libtpu: 0.0.40
codegen_flags: <defaults>
</compile_context>

<pallas_src>
import functools

import jax
import jax.numpy as jnp
from jax.experimental import pallas as pl
from jax.experimental.pallas import tpu as pltpu


def _hw_vmem_and_cores():
    """VMEM capacity and whether the chip has 2 TensorCores sharing it (v7x)."""
    vmem = 128 * 1024 * 1024          # v5e / v6e default
    try:
        info = pltpu.get_tpu_info()
        vmem = int(getattr(info, "vmem_capacity_bytes", vmem))
    except Exception:                  # interpret mode / older jax
        pass
    two_cores = vmem <= 64 * 1024 * 1024   # v7x: 64 MiB per TC, 2 TCs/chip
    return vmem, two_cores


def _den_terms(x, y, p):
    if p == 1:
        return x + y
    if p == 2:
        return x * x + y * y
    return x ** p + y ** p


def _dice_kernel(x_ref, y_ref, num_out, den_out, num_acc, den_acc, *,
                 p, block_rows, acc_rows, ksteps, total_rows, needs_mask):
    i = pl.program_id(0)          # "parallel" shard (TensorCore) index
    k = pl.program_id(1)          # streaming reduction step within this shard

    @pl.when(k == 0)
    def _init():
        num_acc[...] = jnp.zeros_like(num_acc)
        den_acc[...] = jnp.zeros_like(den_acc)

    x = x_ref[...].astype(jnp.float32)
    y = y_ref[...].astype(jnp.float32)
    lane = x.shape[-1]

    def fold(t):
        # Reduce one (block_rows, lane) tile onto the accumulator shape.
        if acc_rows == 1:
            return jnp.sum(t, axis=0, keepdims=True)
        if acc_rows == block_rows:
            return t
        # block_rows is a multiple of 8 == acc_rows: tile-aligned reshape,
        # the axis-0 sum is plain vreg VALU adds (no per-step XLU reduce).
        return jnp.sum(t.reshape(block_rows // acc_rows, acc_rows, lane),
                       axis=0)

    def accumulate(xv, yv):
        num_acc[...] += fold(xv * yv)
        den_acc[...] += fold(_den_terms(xv, yv, p))

    if needs_mask:
        blk = i * ksteps + k
        is_tail = (blk + 1) * block_rows > total_rows

        @pl.when(jnp.logical_not(is_tail))
        def _interior():               # full block: no mask cost at all
            accumulate(x, y)

        @pl.when(is_tail)
        def _tail():
            # Rows at/after `total_rows` belong to the padded tail block or a
            # clamped duplicate block and must contribute nothing (0**p == 0
            # for p >= 1, so zeroing is exact).  (block_rows, 1) sublane
            # predicate broadcasts across lanes inside the selects.
            rid = blk * block_rows + jax.lax.broadcasted_iota(
                jnp.int32, (block_rows, 1), 0)
            valid = rid < total_rows
            accumulate(jnp.where(valid, x, 0.0), jnp.where(valid, y, 0.0))
    else:
        accumulate(x, y)

    @pl.when(k == pl.num_programs(1) - 1)
    def _finalize():
        num_out[...] = jnp.broadcast_to(jnp.sum(num_acc[...]), num_out.shape)
        den_out[...] = jnp.broadcast_to(jnp.sum(den_acc[...]), den_out.shape)


def _partial_sums(x2d, y2d, p, *, two_cores, vmem_bytes, max_block_elems=None):
    """Streaming-reduction kernel over (rows, lane) views.

    Returns (sum(x*y), sum(x**p + y**p)) as f32 scalars.
    """
    rows, lane = x2d.shape
    itemsize = jnp.dtype(x2d.dtype).itemsize

    # Per-input block: ~VMEM/8 bytes (8 MiB on v7x, 16 MiB on v5e/v6e) so that
    # 2 inputs x 2 pipeline buffers sit at ~VMEM/2, leaving slack for scratch.
    target_elems = (vmem_bytes // 8) // itemsize
    if max_block_elems is not None:
        target_elems = min(target_elems, max_block_elems)

    # Sublane packing: 8 rows for 4-byte dtypes, 16 for 2-byte, 32 for 1-byte.
    sub = max(8, 32 // itemsize)
    block_rows = max(sub, (target_elems // lane) // sub * sub)
    if block_rows >= rows:
        block_rows = rows                 # single full-extent block
    row_blocks = pl.cdiv(rows, block_rows)

    # Use the 2-way "parallel" split only where it maps to hardware (v7x); on
    # single-TensorCore chips it just serializes and forces the mask path.
    ncores = 2 if (two_cores and row_blocks >= 2) else 1
    ksteps = pl.cdiv(row_blocks, ncores)
    needs_mask = (rows % block_rows != 0) or (ncores * ksteps != row_blocks)

    # vreg-shaped accumulators when the block is 8-row aligned; otherwise
    # collapse each tile straight to a single lane-wide row.
    acc_rows = 8 if block_rows % 8 == 0 else 1

    def idx(i, k):
        # Clamp so a trailing shard never indexes past the last block; the
        # duplicated block is fully masked out inside the kernel.
        return (jnp.minimum(i * ksteps + k, row_blocks - 1), 0)

    kernel = functools.partial(
        _dice_kernel, p=p, block_rows=block_rows, acc_rows=acc_rows,
        ksteps=ksteps, total_rows=rows, needs_mask=needs_mask)

    total = rows * lane
    cost = pl.CostEstimate(
        flops=6 * total,
        transcendentals=0 if p in (1, 2) else 4 * total,
        bytes_accessed=2 * total * itemsize)

    vmem_limit = min((vmem_bytes * 3) // 4, 100 * 1024 * 1024)

    num_p, den_p = pl.pallas_call(
        kernel,
        out_shape=(jax.ShapeDtypeStruct((1, ncores * 128), jnp.float32),
                   jax.ShapeDtypeStruct((1, ncores * 128), jnp.float32)),
        grid_spec=pltpu.PrefetchScalarGridSpec(
            num_scalar_prefetch=0,
            grid=(ncores, ksteps),
            in_specs=[
                pl.BlockSpec((block_rows, lane), idx),
                pl.BlockSpec((block_rows, lane), idx),
            ],
            out_specs=(
                pl.BlockSpec((1, 128), lambda i, k: (0, i)),
                pl.BlockSpec((1, 128), lambda i, k: (0, i)),
            ),
            scratch_shapes=[
                pltpu.VMEM((acc_rows, lane), jnp.float32),   # num accumulator
                pltpu.VMEM((acc_rows, lane), jnp.float32),   # den accumulator
            ],
        ),
        compiler_params=pltpu.CompilerParams(
            dimension_semantics=("parallel", "arbitrary"),
            vmem_limit_bytes=vmem_limit),
        cost_estimate=cost,
    )(x2d, y2d)

    # Each core's 128-lane output block holds its partial sum broadcast across
    # lanes; take lane 0 of each block and combine.
    return jnp.sum(num_p[0, ::128]), jnp.sum(den_p[0, ::128])


def binary_dice_loss(predict, target, smooth=1.0, p=1, *, _max_block_elems=None):
    """Pallas implementation of BinaryDiceLoss.forward (returns a scalar)."""
    assert predict.shape[0] == target.shape[0], \
        "predict & target batch size don't match"
    assert p >= 1, "zero-masked tails are only neutral for p >= 1"

    x = predict.reshape(-1)
    y = target.reshape(-1)
    total = x.shape[0]

    vmem_bytes, two_cores = _hw_vmem_and_cores()

    # Lane width: largest power-of-two multiple of 128 dividing the element
    # count, so the 1-D -> 2-D view is a free bitcast (no copy).  Otherwise
    # stream the leading floor(total/128)*128 elements through the kernel and
    # add the (<128-element) remainder in plain JAX (no full-array pad).
    lane = 128
    for cand in (1024, 512, 256, 128):
        if total % cand == 0:
            lane = cand
            break
    main = (total // lane) * lane

    num = jnp.float32(0.0)
    den = jnp.float32(0.0)

    if main > 0:
        if main == total:
            xm, ym = x, y
        else:
            # TODO(synk): this slice still materializes a copy of the leading
            # part; only hit when numel % 128 != 0.
            xm = jax.lax.slice(x, (0,), (main,))
            ym = jax.lax.slice(y, (0,), (main,))
        n_p, d_p = _partial_sums(
            xm.reshape(main // lane, lane), ym.reshape(main // lane, lane), p,
            two_cores=two_cores, vmem_bytes=vmem_bytes,
            max_block_elems=_max_block_elems)
        num = num + n_p
        den = den + d_p

    if main < total:                          # < 128 leftover elements
        tx = jax.lax.slice(x, (main,), (total,)).astype(jnp.float32)
        ty = jax.lax.slice(y, (main,), (total,)).astype(jnp.float32)
        num = num + jnp.sum(tx * ty)
        den = den + jnp.sum(_den_terms(tx, ty, p))

    num = 2.0 * num + smooth
    den = den + smooth
    return 1.0 - num / den


def _reference(predict, target, smooth=1.0, p=1):
    n = predict.shape[0]
    x = predict.reshape(n, -1).astype(jnp.float32)
    y = target.reshape(n, -1).astype(jnp.float32)
    num = jnp.sum(x * y) * 2.0 + smooth
    den = jnp.sum(x ** p + y ** p) + smooth
    return 1.0 - num / den


if __name__ == "__main__":
    key = jax.random.PRNGKey(0)
    k1, k2, k3, k4 = jax.random.split(key, 4)

    # Case 1: typical NCHW segmentation-head output, numel % 128 == 0,
    # default p=1 / smooth=1 (the module defaults).
    shape1 = (2, 4, 16, 16)
    pred1 = jax.nn.sigmoid(jax.random.normal(k1, shape1, dtype=jnp.float32))
    targ1 = (jax.random.uniform(k2, shape1) > 0.5).astype(jnp.float32)
    loss1 = jax.block_until_ready(binary_dice_loss(pred1, targ1, smooth=1.0, p=1))
    ref1 = _reference(pred1, targ1, smooth=1.0, p=1)
    assert jnp.allclose(loss1, ref1, rtol=1e-5, atol=1e-5), (loss1, ref1)

    # Case 2: odd numel (% 128 != 0) + tiny forced blocks -> exercises the
    # plain-JAX tail, the in-kernel pl.when tail mask, the multi-step
    # accumulation with the vreg-shaped accumulator fold, and p=2.
    shape2 = (2, 3, 17, 24)       # 2448 elems: lane=128, 19 rows + 16-elem tail
    pred2 = jax.nn.sigmoid(jax.random.normal(k3, shape2, dtype=jnp.float32))
    targ2 = (jax.random.uniform(k4, shape2) > 0.5).astype(jnp.float32)
    loss2 = jax.block_until_ready(
        binary_dice_loss(pred2, targ2, smooth=1.0, p=2,
                         _max_block_elems=16 * 128))
    ref2 = _reference(pred2, targ2, smooth=1.0, p=2)
    assert jnp.allclose(loss2, ref2, rtol=1e-5, atol=1e-5), (loss2, ref2)

    print("KERNEL_OK")
</pallas_src>

<mosaic_0001>
module attributes {stable_mosaic.version = 11 : i64} {
  func.func @_dice_kernel(%arg0: i32, %arg1: i32, %arg2: memref<2x1024xf32, #tpu.memory_space<vmem>>, %arg3: memref<2x1024xf32, #tpu.memory_space<vmem>>, %arg4: memref<1x128xf32, #tpu.memory_space<vmem>>, %arg5: memref<1x128xf32, #tpu.memory_space<vmem>>, %arg6: memref<1x1024xf32, #tpu.memory_space<vmem>>, %arg7: memref<1x1024xf32, #tpu.memory_space<vmem>>) attributes {dimension_semantics = [#tpu.dimension_semantics<parallel>, #tpu.dimension_semantics<arbitrary>], iteration_bounds = array<i64: 1, 1>, scalar_prefetch = 0 : i64, scratch_operands = 2 : i64, tpu.core_type = #tpu.core_type<tc>, window_params = [{transform_indices = @transform_0, window_bounds = array<i64: 2, 1024>}, {transform_indices = @transform_1, window_bounds = array<i64: 2, 1024>}, {transform_indices = @transform_2, window_bounds = array<i64: 1, 128>}, {transform_indices = @transform_3, window_bounds = array<i64: 1, 128>}]} {
    %c0_i32 = arith.constant 0 : i32
    %0 = arith.cmpi eq, %arg1, %c0_i32 : i32
    %1 = arith.extui %0 : i1 to i32
    %c0_i32_0 = arith.constant 0 : i32
    %2 = arith.cmpi ne, %1, %c0_i32_0 : i32
    scf.if %2 {
      %cst_15 = arith.constant 0.000000e+00 : f32
      %20 = vector.broadcast %cst_15 : f32 to vector<1x1024xf32>
      %c0_16 = arith.constant 0 : index
      %c0_17 = arith.constant 0 : index
      %21 = vector.load %arg6[%c0_16, %c0_17] : memref<1x1024xf32, #tpu.memory_space<vmem>>, vector<1x1024xf32>
      tpu.vector_store %arg6[%c0_16, %c0_17], %20 {strides = array<i32>} : memref<1x1024xf32, #tpu.memory_space<vmem>>, vector<1x1024xf32>,
      %cst_18 = arith.constant 0.000000e+00 : f32
      %22 = vector.broadcast %cst_18 : f32 to vector<1x1024xf32>
      %c0_19 = arith.constant 0 : index
      %c0_20 = arith.constant 0 : index
      %23 = vector.load %arg7[%c0_19, %c0_20] : memref<1x1024xf32, #tpu.memory_space<vmem>>, vector<1x1024xf32>
      tpu.vector_store %arg7[%c0_19, %c0_20], %22 {strides = array<i32>} : memref<1x1024xf32, #tpu.memory_space<vmem>>, vector<1x1024xf32>,
    } else {
    }
    %c0 = arith.constant 0 : index
    %c0_1 = arith.constant 0 : index
    %3 = vector.load %arg2[%c0, %c0_1] : memref<2x1024xf32, #tpu.memory_space<vmem>>, vector<2x1024xf32>
    %c0_2 = arith.constant 0 : index
    %c0_3 = arith.constant 0 : index
    %4 = vector.load %arg3[%c0_2, %c0_3] : memref<2x1024xf32, #tpu.memory_space<vmem>>, vector<2x1024xf32>
    %c0_4 = arith.constant 0 : index
    %c0_5 = arith.constant 0 : index
    %5 = vector.load %arg6[%c0_4, %c0_5] : memref<1x1024xf32, #tpu.memory_space<vmem>>, vector<1x1024xf32>
    %6 = arith.mulf %3, %4 : vector<2x1024xf32>
    %cst = arith.constant dense<0.000000e+00> : vector<1024xf32>
    %7 = vector.multi_reduction <add>, %6, %cst [0] : vector<2x1024xf32> to vector<1024xf32>
    %8 = vector.shape_cast %7 : vector<1024xf32> to vector<1x1024xf32>
    %9 = arith.addf %5, %8 : vector<1x1024xf32>
    %c0_6 = arith.constant 0 : index
    %c0_7 = arith.constant 0 : index
    %10 = vector.load %arg6[%c0_6, %c0_7] : memref<1x1024xf32, #tpu.memory_space<vmem>>, vector<1x1024xf32>
    tpu.vector_store %arg6[%c0_6, %c0_7], %9 {strides = array<i32>} : memref<1x1024xf32, #tpu.memory_space<vmem>>, vector<1x1024xf32>,
    %c0_8 = arith.constant 0 : index
    %c0_9 = arith.constant 0 : index
    %11 = vector.load %arg7[%c0_8, %c0_9] : memref<1x1024xf32, #tpu.memory_space<vmem>>, vector<1x1024xf32>
    %12 = arith.addf %3, %4 : vector<2x1024xf32>
    %cst_10 = arith.constant dense<0.000000e+00> : vector<1024xf32>
    %13 = vector.multi_reduction <add>, %12, %cst_10 [0] : vector<2x1024xf32> to vector<1024xf32>
    %14 = vector.shape_cast %13 : vector<1024xf32> to vector<1x1024xf32>
    %15 = arith.addf %11, %14 : vector<1x1024xf32>
    %c0_11 = arith.constant 0 : index
    %c0_12 = arith.constant 0 : index
    %16 = vector.load %arg7[%c0_11, %c0_12] : memref<1x1024xf32, #tpu.memory_space<vmem>>, vector<1x1024xf32>
    tpu.vector_store %arg7[%c0_11, %c0_12], %15 {strides = array<i32>} : memref<1x1024xf32, #tpu.memory_space<vmem>>, vector<1x1024xf32>,
    %c0_i32_13 = arith.constant 0 : i32
    %17 = arith.cmpi eq, %arg1, %c0_i32_13 : i32
    %18 = arith.extui %17 : i1 to i32
    %c0_i32_14 = arith.constant 0 : i32
    %19 = arith.cmpi ne, %18, %c0_i32_14 : i32
    scf.if %19 {
      %c0_15 = arith.constant 0 : index
      %c0_16 = arith.constant 0 : index
      %20 = vector.load %arg6[%c0_15, %c0_16] : memref<1x1024xf32, #tpu.memory_space<vmem>>, vector<1x1024xf32>
      %21 = vector.shape_cast %20 : vector<1x1024xf32> to vector<1x1x1024xf32>
      %cst_17 = arith.constant dense<0.000000e+00> : vector<1xf32>
      %22 = vector.multi_reduction <add>, %21, %cst_17 [1, 2] : vector<1x1x1024xf32> to vector<1xf32>
      %23 = vector.shape_cast %22 : vector<1xf32> to vector<1x1x1xf32>
      %24 = vector.extract %23[0, 0, 0] : f32 from vector<1x1x1xf32>
      %25 = vector.broadcast %24 : f32 to vector<1x128xf32>
      %c0_18 = arith.constant 0 : index
      %c0_19 = arith.constant 0 : index
      %26 = vector.load %arg4[%c0_18, %c0_19] : memref<1x128xf32, #tpu.memory_space<vmem>>, vector<1x128xf32>
      tpu.vector_store %arg4[%c0_18, %c0_19], %25 {strides = array<i32>} : memref<1x128xf32, #tpu.memory_space<vmem>>, vector<1x128xf32>,
      %c0_20 = arith.constant 0 : index
      %c0_21 = arith.constant 0 : index
      %27 = vector.load %arg7[%c0_20, %c0_21] : memref<1x1024xf32, #tpu.memory_space<vmem>>, vector<1x1024xf32>
      %28 = vector.shape_cast %27 : vector<1x1024xf32> to vector<1x1x1024xf32>
      %cst_22 = arith.constant dense<0.000000e+00> : vector<1xf32>
      %29 = vector.multi_reduction <add>, %28, %cst_22 [1, 2] : vector<1x1x1024xf32> to vector<1xf32>
      %30 = vector.shape_cast %29 : vector<1xf32> to vector<1x1x1xf32>
      %31 = vector.extract %30[0, 0, 0] : f32 from vector<1x1x1xf32>
      %32 = vector.broadcast %31 : f32 to vector<1x128xf32>
      %c0_23 = arith.constant 0 : index
      %c0_24 = arith.constant 0 : index
      %33 = vector.load %arg5[%c0_23, %c0_24] : memref<1x128xf32, #tpu.memory_space<vmem>>, vector<1x128xf32>
      tpu.vector_store %arg5[%c0_23, %c0_24], %32 {strides = array<i32>} : memref<1x128xf32, #tpu.memory_space<vmem>>, vector<1x128xf32>,
    } else {
    }
    return
  }
  func.func @transform_0(%arg0: i32, %arg1: i32) -> (i32, i32) {
    %c1_i32 = arith.constant 1 : i32
    %0 = arith.muli %arg0, %c1_i32 : i32
    %1 = arith.addi %0, %arg1 : i32
    %c0_i32 = arith.constant 0 : i32
    %2 = arith.minsi %1, %c0_i32 : i32
    %c0_i32_0 = arith.constant 0 : i32
    %c0_i32_1 = arith.constant 0 : i32
    return %2, %c0_i32_0 : i32, i32
  }
  func.func @transform_1(%arg0: i32, %arg1: i32) -> (i32, i32) {
    %c1_i32 = arith.constant 1 : i32
    %0 = arith.muli %arg0, %c1_i32 : i32
    %1 = arith.addi %0, %arg1 : i32
    %c0_i32 = arith.constant 0 : i32
    %2 = arith.minsi %1, %c0_i32 : i32
    %c0_i32_0 = arith.constant 0 : i32
    %c0_i32_1 = arith.constant 0 : i32
    return %2, %c0_i32_0 : i32, i32
  }
  func.func @transform_2(%arg0: i32, %arg1: i32) -> (i32, i32) {
    %c0_i32 = arith.constant 0 : i32
    %c0_i32_0 = arith.constant 0 : i32
    return %c0_i32, %arg0 : i32, i32
  }
  func.func @transform_3(%arg0: i32, %arg1: i32) -> (i32, i32) {
    %c0_i32 = arith.constant 0 : i32
    %c0_i32_0 = arith.constant 0 : i32
    return %c0_i32, %arg0 : i32, i32
  }
}

</mosaic_0001>

<llo_original>
// kernel: tpu_custom_call.1
$region0: #{tpu_custom_call.1}
  #allocation0 [shape = 'u32[]', space=smem, size = 0x4, offset = 0x4, fixed_abs, tag = 'smem constant byte address 0x4 - core index']
  #allocation1 [shape = 'u32[144,128]{1,0:T(1,128)}', space=vmem, size = 0x12000, scoped, tag = 'internal scratch']
  #allocation2 [shape = 'f32[1,1024]{1,0:T(1,128)}', space=vmem, size = 0x1000, scoped, tag = 'scratch operand']
  #allocation3 [shape = 'f32[1,1024]{1,0:T(1,128)}', space=vmem, size = 0x1000, scoped, tag = 'scratch operand']
  %s0 = inlined_call_operand.hbm [shape: f32[2,1024], index: 0, kind: input, shape index: {}]
  %s1 = inlined_call_operand.hbm [shape: f32[2,1024], index: 1, kind: input, shape index: {}]
  %s2 = inlined_call_operand.hbm [shape: f32[1,128], index: 2, kind: output, shape index: {0}]
  %s3 = inlined_call_operand.hbm [shape: f32[1,128], index: 3, kind: output, shape index: {1}]
  %4 = xla_tuple %s2, %s3
  %s5 = sld [smem:[#allocation0]]
  $region42: #{tpu_custom_call.1} parent=0
    _
  %s7 = ssub.s32 1, %s5
  %s8 = scalar_select 0, %s7, %s5
  $region1: #{tpu_custom_call.1} parent=0
    #allocation4 [shape = 'u8[8192]{0}', space=vmem, size = 0x2000, scoped, tag = 'input window, operand 0, single buffered']
    #allocation5 [shape = 's32[1]{0}', space=sflag, size = 0x4, scoped, tag = 'scoped memory for tpu_custom_call.1']
    #allocation6 [shape = 's32[1]{0}', space=sflag, size = 0x4, scoped, tag = 'scoped memory for tpu_custom_call.1']
    #allocation7 [shape = 'u8[8192]{0}', space=vmem, size = 0x2000, scoped, tag = 'input window, operand 1, single buffered']
    #allocation8 [shape = 's32[1]{0}', space=sflag, size = 0x4, scoped, tag = 'scoped memory for tpu_custom_call.1']
    #allocation9 [shape = 'u8[512]{0}', space=vmem, size = 0x400, scoped, tag = 'output window, operand 0, single buffered']
    #allocation10 [shape = 'u8[512]{0}', space=vmem, size = 0x400, scoped, tag = 'output window, operand 1, single buffered']
    #allocation11 [shape = 's32[1]{0}', space=sflag, size = 0x4, scoped, tag = 'scoped memory for tpu_custom_call.1']
    %9 = vsyncpa [#allocation5], 0
    %10 = vsyncpa [#allocation8], 0
    %11 = vsyncpa [#allocation6], 0
    %12 = vsyncpa [#allocation11], 0
    // Predicated region
    $region2: #{tpu_custom_call.1} parent=1 // pred_check
      _
    $region3: #{tpu_custom_call.1} parent=1 // pred_check_branch
      %14 = sbr.rel (0) target = $region5
    $region4: #{tpu_custom_call.1} parent=1 // pred_region
      %s15 = sadd.s32 0, 0
      %p16 = scmp.lt.s32.totalorder %s15, 0
      %s17 = scalar_select %p16, %s15, 0
      %s19 = ssub.s32 256, 256
      %20 = vsyncadd [#allocation5], %s19
      %s21 = smul.addr %s17, 8
      %s22 = smul.addr %s21, 32
      %s23 = scalar_lea.hbm %s0, %s22
      %s25 = sshll.u32 [#allocation4], 4
      %s26 = int_to_ptr.vmem [resolvable:$true] %s25
      %28 = dma.hbm_to_vmem [thread:$0]  %s23, 256, %s26, [#allocation5]
    $region5: #{tpu_custom_call.1} parent=1 // pred_fallthru
      _
    // Predicated region
    $region6: #{tpu_custom_call.1} parent=1 // pred_check
      _
    $region7: #{tpu_custom_call.1} parent=1 // pred_check_branch
      %30 = sbr.rel (0) target = $region9
    $region8: #{tpu_custom_call.1} parent=1 // pred_region
      %s31 = sadd.s32 0, 0
      %p32 = scmp.lt.s32.totalorder %s31, 0
      %s33 = scalar_select %p32, %s31, 0
      %s35 = ssub.s32 256, 256
      %36 = vsyncadd [#allocation8], %s35
      %s37 = smul.addr %s33, 8
      %s38 = smul.addr %s37, 32
      %s39 = scalar_lea.hbm %s1, %s38
      %s41 = sshll.u32 [#allocation7], 4
      %s42 = int_to_ptr.vmem [resolvable:$true] %s41
      %44 = dma.hbm_to_vmem [thread:$0]  %s39, 256, %s42, [#allocation8]
    $region9: #{tpu_custom_call.1} parent=1 // pred_fallthru
      _
    // Predicated region
    $region10: #{tpu_custom_call.1} parent=1 // pred_check
      _
    $region11: #{tpu_custom_call.1} parent=1 // pred_check_branch
      %46 = sbr.rel (0) target = $region13
    $region12: #{tpu_custom_call.1} parent=1 // pred_region
      %47 = dma.done [#allocation5], 256
    $region13: #{tpu_custom_call.1} parent=1 // pred_fallthru
      _
    // Predicated region
    $region14: #{tpu_custom_call.1} parent=1 // pred_check
      _
    $region15: #{tpu_custom_call.1} parent=1 // pred_check_branch
      %49 = sbr.rel (0) target = $region17
    $region16: #{tpu_custom_call.1} parent=1 // pred_region
      %50 = dma.done [#allocation8], 256
    $region17: #{tpu_custom_call.1} parent=1 // pred_fallthru
      _
    %s51 = sadd.s32 0, 0
    %p52 = scmp.lt.s32.totalorder %s51, 0
    %s53 = scalar_select %p52, %s51, 0
    %s54 = sadd.s32 0, 0
    %p55 = scmp.lt.s32.totalorder %s54, 0
    %s56 = scalar_select %p55, %s54, 0
    %p57 = scmp.eq.s32.totalorder 0, 0
    // Predicated region
    $region18: #{tpu_custom_call.1} parent=1 // pred_check
      %p58 = pneg %p57
    $region19: #{tpu_custom_call.1} parent=1 // pred_check_branch
      %60 = sbr.rel (%p58) target = $region21
    $region20: #{tpu_custom_call.1} parent=1 // pred_region
      %61 = vst [vmem:[#allocation2] sm:$0xff] 0.0
      %62 = vst [vmem:[#allocation3] sm:$0xff] 0.0
    $region21: #{tpu_custom_call.1} parent=1 // pred_fallthru
      _
    %v63 = vld [vmem:[#allocation4] sm:$0xff]
    %v64 = vld [vmem:[#allocation4 + $0x8] sm:$0xff]
    %v65 = vld [vmem:[#allocation7] sm:$0xff]
    %v66 = vld [vmem:[#allocation7 + $0x8] sm:$0xff]
    %v67 = vld [vmem:[#allocation2] sm:$0xff]
    %v68 = vmul.f32 %v63, %v65
    %v69 = vmul.f32 %v64, %v66
    %v72 = vcombine.high %v68, %v68
    %v74 = vunpack.c.l.s4 1983009808
    %v75 = vunpack.c.0.s8 %v74
    %v76 = vlaneseq
    %v77 = vshrl.u32 %v76, 7
    %v78 = vsub.s32 %v75, %v77
    %v79 = vrot.slane %v68, %v78
    %v81 = vunpack.c.l.s4 1983009808
    %v82 = vunpack.c.0.s8 %v81
    %v83 = vlaneseq
    %v84 = vshrl.u32 %v83, 7
    %v85 = vsub.s32 %v82, %v84
    %v86 = vrot.slane %v72, %v85
    %v87 = vcombine.high %v79, %v79
    %v88 = vcombine.high %v86, %v86
    %v89 = vcombine.high %v69, %v69
    %v91 = vunpack.c.l.s4 1983009808
    %v92 = vunpack.c.0.s8 %v91
    %v93 = vlaneseq
    %v94 = vshrl.u32 %v93, 7
    %v95 = vsub.s32 %v92, %v94
    %v96 = vrot.slane %v69, %v95
    %v98 = vunpack.c.l.s4 1983009808
    %v99 = vunpack.c.0.s8 %v98
    %v100 = vlaneseq
    %v101 = vshrl.u32 %v100, 7
    %v102 = vsub.s32 %v99, %v101
    %v103 = vrot.slane %v89, %v102
    %v104 = vcombine.high %v96, %v96
    %v105 = vcombine.high %v103, %v103
    %vm114 = vcmask 1041408
    %v115 = vsel %vm114, %v79, 0.0
    %v116 = vrot.slane %v115, 4
    %v117 = vadd.f32 %v115, %v116
    %v118 = vrot.slane %v117, 2
    %v119 = vadd.f32 %v117, %v118
    %v120 = vrot.slane %v119, 1
    %v121 = vadd.f32 %v119, %v120
    %v122 = vsel %vm114, %v87, 0.0
    %v123 = vrot.slane %v122, 4
    %v124 = vadd.f32 %v122, %v123
    %v125 = vrot.slane %v124, 2
    %v126 = vadd.f32 %v124, %v125
    %v127 = vrot.slane %v126, 1
    %v128 = vadd.f32 %v126, %v127
    %v129 = vsel %vm114, %v86, 0.0
    %v130 = vrot.slane %v129, 4
    %v131 = vadd.f32 %v129, %v130
    %v132 = vrot.slane %v131, 2
    %v133 = vadd.f32 %v131, %v132
    %v134 = vrot.slane %v133, 1
    %v135 = vadd.f32 %v133, %v134
    %v136 = vsel %vm114, %v88, 0.0
    %v137 = vrot.slane %v136, 4
    %v138 = vadd.f32 %v136, %v137
    %v139 = vrot.slane %v138, 2
    %v140 = vadd.f32 %v138, %v139
    %v141 = vrot.slane %v140, 1
    %v142 = vadd.f32 %v140, %v141
    %v143 = vsel %vm114, %v96, 0.0
    %v144 = vrot.slane %v143, 4
    %v145 = vadd.f32 %v143, %v144
    %v146 = vrot.slane %v145, 2
    %v147 = vadd.f32 %v145, %v146
    %v148 = vrot.slane %v147, 1
    %v149 = vadd.f32 %v147, %v148
    %v150 = vsel %vm114, %v104, 0.0
    %v151 = vrot.slane %v150, 4
    %v152 = vadd.f32 %v150, %v151
    %v153 = vrot.slane %v152, 2
    %v154 = vadd.f32 %v152, %v153
    %v155 = vrot.slane %v154, 1
    %v156 = vadd.f32 %v154, %v155
    %v157 = vsel %vm114, %v103, 0.0
    %v158 = vrot.slane %v157, 4
    %v159 = vadd.f32 %v157, %v158
    %v160 = vrot.slane %v159, 2
    %v161 = vadd.f32 %v159, %v160
    %v162 = vrot.slane %v161, 1
    %v163 = vadd.f32 %v161, %v162
    %v164 = vsel %vm114, %v105, 0.0
    %v165 = vrot.slane %v164, 4
    %v166 = vadd.f32 %v164, %v165
    %v167 = vrot.slane %v166, 2
    %v168 = vadd.f32 %v166, %v167
    %v169 = vrot.slane %v168, 1
    %v170 = vadd.f32 %v168, %v169
    %v179 = vcombine.low %v121, %v128
    %v180 = vcombine.low %v135, %v142
    %v181 = vcombine.low %v149, %v156
    %v182 = vcombine.low %v163, %v170
    %v184 = vunpack.c.l.s4 1966171168
    %v185 = vunpack.c.0.s8 %v184
    %v186 = vlaneseq
    %v187 = vshrl.u32 %v186, 7
    %v188 = vsub.s32 %v185, %v187
    %v189 = vrot.slane %v179, %v188
    %v191 = vunpack.c.l.s4 1966171168
    %v192 = vunpack.c.0.s8 %v191
    %v193 = vlaneseq
    %v194 = vshrl.u32 %v193, 7
    %v195 = vsub.s32 %v192, %v194
    %v196 = vrot.slane %v180, %v195
    %v198 = vunpack.c.l.s4 1966171168
    %v199 = vunpack.c.0.s8 %v198
    %v200 = vlaneseq
    %v201 = vshrl.u32 %v200, 7
    %v202 = vsub.s32 %v199, %v201
    %v203 = vrot.slane %v181, %v202
    %v205 = vunpack.c.l.s4 1966171168
    %v206 = vunpack.c.0.s8 %v205
    %v207 = vlaneseq
    %v208 = vshrl.u32 %v207, 7
    %v209 = vsub.s32 %v206, %v208
    %v210 = vrot.slane %v182, %v209
    %v211 = vcombine.low %v189, %v196
    %v212 = vcombine.low %v203, %v210
    %v214 = vunpack.c.l.s4 1966171168
    %v215 = vunpack.c.0.s8 %v214
    %v216 = vlaneseq
    %v217 = vshrl.u32 %v216, 7
    %v218 = vsub.s32 %v215, %v217
    %v219 = vrot.slane %v211, %v218
    %v221 = vunpack.c.l.s4 1966171168
    %v222 = vunpack.c.0.s8 %v221
    %v223 = vlaneseq
    %v224 = vshrl.u32 %v223, 7
    %v225 = vsub.s32 %v222, %v224
    %v226 = vrot.slane %v212, %v225
    %v227 = vcombine.low %v219, %v226
    %v229 = vadd.f32 %v67, %v227
    %230 = vst [vmem:[#allocation2] sm:$0xff] %v229
    %v231 = vld [vmem:[#allocation3] sm:$0xff]
    %v232 = vadd.f32 %v63, %v65
    %v233 = vadd.f32 %v64, %v66
    %v236 = vcombine.high %v232, %v232
    %v238 = vunpack.c.l.s4 1983009808
    %v239 = vunpack.c.0.s8 %v238
    %v240 = vlaneseq
    %v241 = vshrl.u32 %v240, 7
    %v242 = vsub.s32 %v239, %v241
    %v243 = vrot.slane %v232, %v242
    %v245 = vunpack.c.l.s4 1983009808
    %v246 = vunpack.c.0.s8 %v245
    %v247 = vlaneseq
    %v248 = vshrl.u32 %v247, 7
    %v249 = vsub.s32 %v246, %v248
    %v250 = vrot.slane %v236, %v249
    %v251 = vcombine.high %v243, %v243
    %v252 = vcombine.high %v250, %v250
    %v253 = vcombine.high %v233, %v233
    %v255 = vunpack.c.l.s4 1983009808
    %v256 = vunpack.c.0.s8 %v255
    %v257 = vlaneseq
    %v258 = vshrl.u32 %v257, 7
    %v259 = vsub.s32 %v256, %v258
    %v260 = vrot.slane %v233, %v259
    %v262 = vunpack.c.l.s4 1983009808
    %v263 = vunpack.c.0.s8 %v262
    %v264 = vlaneseq
    %v265 = vshrl.u32 %v264, 7
    %v266 = vsub.s32 %v263, %v265
    %v267 = vrot.slane %v253, %v266
    %v268 = vcombine.high %v260, %v260
    %v269 = vcombine.high %v267, %v267
    %v278 = vsel %vm114, %v243, 0.0
    %v279 = vrot.slane %v278, 4
    %v280 = vadd.f32 %v278, %v279
    %v281 = vrot.slane %v280, 2
    %v282 = vadd.f32 %v280, %v281
    %v283 = vrot.slane %v282, 1
    %v284 = vadd.f32 %v282, %v283
    %v285 = vsel %vm114, %v251, 0.0
    %v286 = vrot.slane %v285, 4
    %v287 = vadd.f32 %v285, %v286
    %v288 = vrot.slane %v287, 2
    %v289 = vadd.f32 %v287, %v288
    %v290 = vrot.slane %v289, 1
    %v291 = vadd.f32 %v289, %v290
    %v292 = vsel %vm114, %v250, 0.0
    %v293 = vrot.slane %v292, 4
    %v294 = vadd.f32 %v292, %v293
    %v295 = vrot.slane %v294, 2
    %v296 = vadd.f32 %v294, %v295
    %v297 = vrot.slane %v296, 1
    %v298 = vadd.f32 %v296, %v297
    %v299 = vsel %vm114, %v252, 0.0
    %v300 = vrot.slane %v299, 4
    %v301 = vadd.f32 %v299, %v300
    %v302 = vrot.slane %v301, 2
    %v303 = vadd.f32 %v301, %v302
    %v304 = vrot.slane %v303, 1
    %v305 = vadd.f32 %v303, %v304
    %v306 = vsel %vm114, %v260, 0.0
    %v307 = vrot.slane %v306, 4
    %v308 = vadd.f32 %v306, %v307
    %v309 = vrot.slane %v308, 2
    %v310 = vadd.f32 %v308, %v309
    %v311 = vrot.slane %v310, 1
    %v312 = vadd.f32 %v310, %v311
    %v313 = vsel %vm114, %v268, 0.0
    %v314 = vrot.slane %v313, 4
    %v315 = vadd.f32 %v313, %v314
    %v316 = vrot.slane %v315, 2
    %v317 = vadd.f32 %v315, %v316
    %v318 = vrot.slane %v317, 1
    %v319 = vadd.f32 %v317, %v318
    %v320 = vsel %vm114, %v267, 0.0
    %v321 = vrot.slane %v320, 4
    %v322 = vadd.f32 %v320, %v321
    %v323 = vrot.slane %v322, 2
    %v324 = vadd.f32 %v322, %v323
    %v325 = vrot.slane %v324, 1
    %v326 = vadd.f32 %v324, %v325
    %v327 = vsel %vm114, %v269, 0.0
    %v328 = vrot.slane %v327, 4
    %v329 = vadd.f32 %v327, %v328
    %v330 = vrot.slane %v329, 2
    %v331 = vadd.f32 %v329, %v330
    %v332 = vrot.slane %v331, 1
    %v333 = vadd.f32 %v331, %v332
    %v342 = vcombine.low %v284, %v291
    %v343 = vcombine.low %v298, %v305
    %v344 = vcombine.low %v312, %v319
    %v345 = vcombine.low %v326, %v333
    %v347 = vunpack.c.l.s4 1966171168
    %v348 = vunpack.c.0.s8 %v347
    %v349 = vlaneseq
    %v350 = vshrl.u32 %v349, 7
    %v351 = vsub.s32 %v348, %v350
    %v352 = vrot.slane %v342, %v351
    %v354 = vunpack.c.l.s4 1966171168
    %v355 = vunpack.c.0.s8 %v354
    %v356 = vlaneseq
    %v357 = vshrl.u32 %v356, 7
    %v358 = vsub.s32 %v355, %v357
    %v359 = vrot.slane %v343, %v358
    %v361 = vunpack.c.l.s4 1966171168
    %v362 = vunpack.c.0.s8 %v361
    %v363 = vlaneseq
    %v364 = vshrl.u32 %v363, 7
    %v365 = vsub.s32 %v362, %v364
    %v366 = vrot.slane %v344, %v365
    %v368 = vunpack.c.l.s4 1966171168
    %v369 = vunpack.c.0.s8 %v368
    %v370 = vlaneseq
    %v371 = vshrl.u32 %v370, 7
    %v372 = vsub.s32 %v369, %v371
    %v373 = vrot.slane %v345, %v372
    %v374 = vcombine.low %v352, %v359
    %v375 = vcombine.low %v366, %v373
    %v377 = vunpack.c.l.s4 1966171168
    %v378 = vunpack.c.0.s8 %v377
    %v379 = vlaneseq
    %v380 = vshrl.u32 %v379, 7
    %v381 = vsub.s32 %v378, %v380
    %v382 = vrot.slane %v374, %v381
    %v384 = vunpack.c.l.s4 1966171168
    %v385 = vunpack.c.0.s8 %v384
    %v386 = vlaneseq
    %v387 = vshrl.u32 %v386, 7
    %v388 = vsub.s32 %v385, %v387
    %v389 = vrot.slane %v375, %v388
    %v390 = vcombine.low %v382, %v389
    %v392 = vadd.f32 %v231, %v390
    %393 = vst [vmem:[#allocation3] sm:$0xff] %v392
    // Predicated region
    $region22: #{tpu_custom_call.1} parent=1 // pred_check
      %p394 = pneg %p57
    $region23: #{tpu_custom_call.1} parent=1 // pred_check_branch
      %396 = sbr.rel (%p394) target = $region25
    $region24: #{tpu_custom_call.1} parent=1 // pred_region
      %v397 = vld [vmem:[#allocation2] sm:$0xff]
      %v399 = vlaneseq
      %v400 = vshrl.u32 %v399, 7
      %v401 = vsub.s32 0, %v400
      %v402 = vrot.slane %v397, %v401
      %v403 = vlaneseq
      %v404 = vshrl.u32 %v403, 7
      %v405 = vsub.s32 1, %v404
      %v406 = vrot.slane %v397, %v405
      %v407 = vlaneseq
      %v408 = vshrl.u32 %v407, 7
      %v409 = vsub.s32 2, %v408
      %v410 = vrot.slane %v397, %v409
      %v411 = vlaneseq
      %v412 = vshrl.u32 %v411, 7
      %v413 = vsub.s32 3, %v412
      %v414 = vrot.slane %v397, %v413
      %v415 = vlaneseq
      %v416 = vshrl.u32 %v415, 7
      %v417 = vsub.s32 4, %v416
      %v418 = vrot.slane %v397, %v417
      %v419 = vlaneseq
      %v420 = vshrl.u32 %v419, 7
      %v421 = vsub.s32 5, %v420
      %v422 = vrot.slane %v397, %v421
      %v423 = vlaneseq
      %v424 = vshrl.u32 %v423, 7
      %v425 = vsub.s32 6, %v424
      %v426 = vrot.slane %v397, %v425
      %v427 = vlaneseq
      %v428 = vshrl.u32 %v427, 7
      %v429 = vsub.s32 7, %v428
      %v430 = vrot.slane %v397, %v429
      %vm439 = vcmask 1040384
      %v440 = vsel %vm439, %v402, 0.0
      %v441 = vsel %vm439, %v406, 0.0
      %v442 = vadd.f32 %v440, %v441
      %v443 = vsel %vm439, %v410, 0.0
      %v444 = vadd.f32 %v442, %v443
      %v445 = vsel %vm439, %v414, 0.0
      %v446 = vadd.f32 %v444, %v445
      %v447 = vsel %vm439, %v418, 0.0
      %v448 = vadd.f32 %v446, %v447
      %v449 = vsel %vm439, %v422, 0.0
      %v450 = vadd.f32 %v448, %v449
      %v451 = vsel %vm439, %v426, 0.0
      %v452 = vadd.f32 %v450, %v451
      %v453 = vsel %vm439, %v430, 0.0
      %v454 = vadd.f32 %v452, %v453
      %455 = vadd.xlane.f32.xlu0 %v454
      %v456 = vpop.xlane.xlu0 %455
      %v457 = vrot.slane %v456, 4
      %v458 = vadd.f32 %v456, %v457
      %v459 = vrot.slane %v458, 2
      %v460 = vadd.f32 %v458, %v459
      %v461 = vrot.slane %v460, 1
      %v462 = vadd.f32 %v460, %v461
      %s463 = vtos %v462
      %v464 = vstv %s463
      %465 = vst [vmem:[#allocation9] sm:$0x1] %v464
      %v466 = vld [vmem:[#allocation3] sm:$0xff]
      %v468 = vlaneseq
      %v469 = vshrl.u32 %v468, 7
      %v470 = vsub.s32 0, %v469
      %v471 = vrot.slane %v466, %v470
      %v472 = vlaneseq
      %v473 = vshrl.u32 %v472, 7
      %v474 = vsub.s32 1, %v473
      %v475 = vrot.slane %v466, %v474
      %v476 = vlaneseq
      %v477 = vshrl.u32 %v476, 7
      %v478 = vsub.s32 2, %v477
      %v479 = vrot.slane %v466, %v478
      %v480 = vlaneseq
      %v481 = vshrl.u32 %v480, 7
      %v482 = vsub.s32 3, %v481
      %v483 = vrot.slane %v466, %v482
      %v484 = vlaneseq
      %v485 = vshrl.u32 %v484, 7
      %v486 = vsub.s32 4, %v485
      %v487 = vrot.slane %v466, %v486
      %v488 = vlaneseq
      %v489 = vshrl.u32 %v488, 7
      %v490 = vsub.s32 5, %v489
      %v491 = vrot.slane %v466, %v490
      %v492 = vlaneseq
      %v493 = vshrl.u32 %v492, 7
      %v494 = vsub.s32 6, %v493
      %v495 = vrot.slane %v466, %v494
      %v496 = vlaneseq
      %v497 = vshrl.u32 %v496, 7
      %v498 = vsub.s32 7, %v497
      %v499 = vrot.slane %v466, %v498
      %v508 = vsel %vm439, %v471, 0.0
      %v509 = vsel %vm439, %v475, 0.0
      %v510 = vadd.f32 %v508, %v509
      %v511 = vsel %vm439, %v479, 0.0
      %v512 = vadd.f32 %v510, %v511
      %v513 = vsel %vm439, %v483, 0.0
      %v514 = vadd.f32 %v512, %v513
      %v515 = vsel %vm439, %v487, 0.0
      %v516 = vadd.f32 %v514, %v515
      %v517 = vsel %vm439, %v491, 0.0
      %v518 = vadd.f32 %v516, %v517
      %v519 = vsel %vm439, %v495, 0.0
      %v520 = vadd.f32 %v518, %v519
      %v521 = vsel %vm439, %v499, 0.0
      %v522 = vadd.f32 %v520, %v521
      %523 = vadd.xlane.f32.xlu0 %v522
      %v524 = vpop.xlane.xlu0 %523
      %v525 = vrot.slane %v524, 4
      %v526 = vadd.f32 %v524, %v525
      %v527 = vrot.slane %v526, 2
      %v528 = vadd.f32 %v526, %v527
      %v529 = vrot.slane %v528, 1
      %v530 = vadd.f32 %v528, %v529
      %s531 = vtos %v530
      %v532 = vstv %s531
      %533 = vst [vmem:[#allocation10] sm:$0x1] %v532
    $region25: #{tpu_custom_call.1} parent=1 // pred_fallthru
      _
    // Predicated region
    $region26: #{tpu_custom_call.1} parent=1 // pred_check
      _
    $region27: #{tpu_custom_call.1} parent=1 // pred_check_branch
      %535 = sbr.rel (0) target = $region29
    $region28: #{tpu_custom_call.1} parent=1 // pred_region
      %s537 = ssub.s32 16, 16
      %538 = vsyncadd [#allocation6], %s537
      %s540 = sshll.u32 [#allocation9], 4
      %s541 = int_to_ptr.vmem [resolvable:$true] %s540
      %543 = dma.vmem_to_hbm [thread:$0]  %s541, 16, %s2, [#allocation6]
    $region29: #{tpu_custom_call.1} parent=1 // pred_fallthru
      _
    // Predicated region
    $region30: #{tpu_custom_call.1} parent=1 // pred_check
      _
    $region31: #{tpu_custom_call.1} parent=1 // pred_check_branch
      %545 = sbr.rel (0) target = $region33
    $region32: #{tpu_custom_call.1} parent=1 // pred_region
      %s547 = ssub.s32 16, 16
      %548 = vsyncadd [#allocation11], %s547
      %s550 = sshll.u32 [#allocation10], 4
      %s551 = int_to_ptr.vmem [resolvable:$true] %s550
      %553 = dma.vmem_to_hbm [thread:$0]  %s551, 16, %s3, [#allocation11]
    $region33: #{tpu_custom_call.1} parent=1 // pred_fallthru
      _
    // Predicated region
    $region34: #{tpu_custom_call.1} parent=1 // pred_check
      _
    $region35: #{tpu_custom_call.1} parent=1 // pred_check_branch
      %555 = sbr.rel (0) target = $region37
    $region36: #{tpu_custom_call.1} parent=1 // pred_region
      %556 = dma.done [#allocation6], 16
    $region37: #{tpu_custom_call.1} parent=1 // pred_fallthru
      _
    // Predicated region
    $region38: #{tpu_custom_call.1} parent=1 // pred_check
      _
    $region39: #{tpu_custom_call.1} parent=1 // pred_check_branch
      %558 = sbr.rel (0) target = $region41
    $region40: #{tpu_custom_call.1} parent=1 // pred_region
      %559 = dma.done [#allocation11], 16
    $region41: #{tpu_custom_call.1} parent=1 // pred_fallthru
      _
    %560 = vsyncpa [#allocation5], 1
    %561 = vsyncpa [#allocation8], 1
    %562 = vsyncpa [#allocation6], 1
    %563 = vsyncpa [#allocation11], 1

</llo_original>
